<compile_context>
chip_gen: v6e
topology: v6e:2x2x1
jax: 0.10.0
libtpu: 0.0.40
codegen_flags: <defaults>
</compile_context>

<pallas_src>
import functools
import math

import jax
import jax.numpy as jnp
from jax.experimental import pallas as pl
from jax.experimental.pallas import tpu as pltpu


# ----------------------------- small helpers ---------------------------------

def _mm(x, w):
    """bf16 MXU matmul with f32 accumulation (w is already bf16)."""
    return jnp.dot(x.astype(jnp.bfloat16), w, preferred_element_type=jnp.float32)


def _layer_norm(x, gamma, beta, eps=1e-5):
    # x: (L, H) f32; gamma/beta: (1, H) f32 -- matches nn.LayerNorm(hid_dim)
    mu = jnp.mean(x, axis=-1, keepdims=True)
    var = jnp.mean((x - mu) ** 2, axis=-1, keepdims=True)
    return (x - mu) * jax.lax.rsqrt(var + eps) * gamma + beta


def _single_buffered_spec(shape, index_map):
    """BlockSpec for data whose block index never changes across grid steps.
    Single pipeline buffer (double-buffering constants is pure VMEM waste); falls back to a
    plain BlockSpec on JAX versions without pipeline_mode support."""
    if hasattr(pl, "Buffered"):
        try:
            return pl.BlockSpec(shape, index_map, pipeline_mode=pl.Buffered(1))
        except TypeError:
            pass
    return pl.BlockSpec(shape, index_map)


def _vmem_limit_bytes():
    """Chip-aware scoped-VMEM budget: ~100 MiB on v5e/v6e (128 MiB physical), ~56 MiB on v7x
    (64 MiB physical).  Falls back to 64 MiB if the query is unavailable."""
    try:
        cap = getattr(pltpu.get_tpu_info(), "vmem_capacity_bytes", None)
        if cap:
            return int(min(cap * 7 // 8, 100 * 1024 * 1024))
    except Exception:
        pass
    return 64 * 1024 * 1024


# ------------------------- K/V projection kernel ------------------------------

def kv_project_kernel(x_ref, wkv_ref, bkv_ref, k_ref, v_ref, *, n_heads, dh):
    H = n_heads * dh
    kv = _mm(x_ref[0], wkv_ref[...]) + bkv_ref[...]          # (L, 2H) f32, single wide matmul
    # Head-major bf16 outputs so every per-head read in the attention kernel is a contiguous,
    # lane-aligned tile (the one-time lane slicing happens here, once per token).
    for h in range(n_heads):
        k_ref[0, h] = kv[:, h * dh:(h + 1) * dh].astype(jnp.bfloat16)
        v_ref[0, h] = kv[:, H + h * dh:H + (h + 1) * dh].astype(jnp.bfloat16)


def kv_project(x, wkv, bkv, n_heads):
    """K/V projection computed ONCE per sequence (not per query tile), head-major bf16."""
    B, L, H = x.shape
    dh = H // n_heads
    kernel = functools.partial(kv_project_kernel, n_heads=n_heads, dh=dh)
    # TODO(synk): for very long sequences tile this over L as well (grid=(B, L//tile_l)).
    return pl.pallas_call(
        kernel,
        out_shape=(jax.ShapeDtypeStruct((B, n_heads, L, dh), jnp.bfloat16),
                   jax.ShapeDtypeStruct((B, n_heads, L, dh), jnp.bfloat16)),
        grid=(B,),
        in_specs=[
            pl.BlockSpec((1, L, H), lambda b: (b, 0, 0)),
            _single_buffered_spec(wkv.shape, lambda b: (0, 0)),
            _single_buffered_spec(bkv.shape, lambda b: (0, 0)),
        ],
        out_specs=(pl.BlockSpec((1, n_heads, L, dh), lambda b: (b, 0, 0, 0)),
                   pl.BlockSpec((1, n_heads, L, dh), lambda b: (b, 0, 0, 0))),
        compiler_params=pltpu.CompilerParams(
            dimension_semantics=("parallel",),
            vmem_limit_bytes=_vmem_limit_bytes(),
        ),
    )(x, wkv, bkv)


# ----------------------------- attention helper --------------------------------

def _attention(x, k_hm, v_hm, bias, wq, bq, wo, bo, n_heads, inv_scale):
    """Multi-head attention for one (batch, query-tile) block.

    x:    (Lq, H)           f32 query rows of this tile
    k_hm: (n_heads, Lk, dh) bf16 head-major keys   (precomputed, full sequence)
    v_hm: (n_heads, Lk, dh) bf16 head-major values (precomputed, full sequence)
    bias: (Lq, Lk)          f32 additive mask (0 keep / -1e30 masked), shared by all heads
    """
    Lq, H = x.shape
    dh = H // n_heads
    q = (_mm(x, wq) + bq) * inv_scale                       # (Lq, H) f32; 1/scale applied once
    ctx = []
    # TODO(synk): for very large n_heads switch to lax.fori_loop writing into a VMEM scratch
    #             (bounds live ranges); a static unroll is fine for <=16 heads.
    for h in range(n_heads):
        q_h = q[:, h * dh:(h + 1) * dh].astype(jnp.bfloat16)
        # Contraction over the last dim of BOTH operands: no materialized K^T (no XLU transpose).
        s = jax.lax.dot_general(q_h, k_hm[h],
                                dimension_numbers=(((1,), (1,)), ((), ())),
                                preferred_element_type=jnp.float32) + bias   # (Lq, Lk) f32
        m = jnp.max(s, axis=-1, keepdims=True)
        p = jnp.exp(s - m)                                   # f32 exp (v5e EUP has no bf16)
        attn = p * pl.reciprocal(jnp.sum(p, axis=-1, keepdims=True), approx=True)
        ctx.append(jnp.dot(attn.astype(jnp.bfloat16), v_hm[h],
                           preferred_element_type=jnp.float32))              # (Lq, dh)
    # One lane-offset concatenate + a single K=H output projection (full MXU depth)
    # instead of n_heads K=dh matmuls.
    return _mm(jnp.concatenate(ctx, axis=-1), wo) + bo


# --------------------------------- main kernel ---------------------------------

def decoder_layer_kernel(trgq_ref, tmask_ref, smask_ref,
                         k_sa_ref, v_sa_ref, k_ea_ref, v_ea_ref,
                         sa_wq, sa_bq, sa_wo, sa_bo,
                         ea_wq, ea_bq, ea_wo, ea_bo,
                         pf_w1, pf_b1, pf_w2, pf_b2,
                         ln_g, ln_b,
                         out_ref, *, n_heads, inv_scale):
    xq = trgq_ref[0]                 # (TILE_T, H) f32: query / residual rows of this tile
    g, beta = ln_g[...], ln_b[...]   # (1, H)

    # int8 mask -> additive f32 bias, once per attention (shared by every head).
    # NOTE: fully-masked rows yield a uniform distribution rather than NaN (torch -inf);
    #       intentional and matched by the reference.
    tbias = jnp.where(tmask_ref[0] == 0, jnp.float32(-1e30), jnp.float32(0.0))   # (TILE_T, T)
    sbias = jnp.where(smask_ref[0] == 0, jnp.float32(-1e30), jnp.float32(0.0))   # (TILE_T, S)

    # TODO(synk): nn.Dropout has no inference-time effect; it is omitted (identity).

    # 1) masked self-attention + residual + LayerNorm
    x = _layer_norm(
        xq + _attention(xq, k_sa_ref[0], v_sa_ref[0], tbias,
                        sa_wq[...], sa_bq[...], sa_wo[...], sa_bo[...],
                        n_heads, inv_scale),
        g, beta)

    # 2) encoder-decoder attention + residual + LayerNorm
    x = _layer_norm(
        x + _attention(x, k_ea_ref[0], v_ea_ref[0], sbias,
                       ea_wq[...], ea_bq[...], ea_wo[...], ea_bo[...],
                       n_heads, inv_scale),
        g, beta)

    # 3) position-wise feed-forward (Conv1d k=1 == per-position Linear) + residual + LayerNorm
    h1 = jnp.maximum(_mm(x, pf_w1[...]) + pf_b1[...], 0.0)
    ff = _mm(h1, pf_w2[...]) + pf_b2[...]
    x = _layer_norm(x + ff, g, beta)

    out_ref[0] = x.astype(out_ref.dtype)


# ---------------------------------- wrapper ------------------------------------

MAIN_WEIGHTS = ['sa_wq', 'sa_bq', 'sa_wo', 'sa_bo',
                'ea_wq', 'ea_bq', 'ea_wo', 'ea_bo',
                'pf_w1', 'pf_b1', 'pf_w2', 'pf_b2',
                'ln_g', 'ln_b']


def decoder_layer(trg, src, trg_mask, src_mask, params, n_heads, tile_t=None):
    B, T, H = trg.shape
    S = src.shape[1]
    assert H % n_heads == 0, "hid_dim must be divisible by n_heads"
    dh = H // n_heads
    if tile_t is None:
        tile_t = min(T, 128)
    assert T % tile_t == 0, "target length must be divisible by the tile size"
    assert tile_t == T or tile_t % 32 == 0, \
        "tile size must be a multiple of 32 (int8 mask sublane tiling) or the full length"
    inv_scale = 1.0 / math.sqrt(dh)
    n_t = T // tile_t

    # K/V projections hoisted out of the fused kernel: computed once per sequence,
    # not once per query tile.  Head-major bf16 layout.
    k_sa, v_sa = kv_project(trg, params['sa_wkv'], params['sa_bkv'], n_heads)
    k_ea, v_ea = kv_project(src, params['ea_wkv'], params['ea_bkv'], n_heads)

    # int8 masks: 4x less HBM / VMEM traffic than f32 masks.
    tmask = (trg_mask != 0).astype(jnp.int8)
    smask = (src_mask != 0).astype(jnp.int8)

    wlist = [params[name] for name in MAIN_WEIGHTS]

    in_specs = [
        pl.BlockSpec((1, tile_t, H), lambda b, t: (b, t, 0)),           # query / residual rows
        pl.BlockSpec((1, tile_t, T), lambda b, t: (b, t, 0)),           # trg_mask rows (int8)
        pl.BlockSpec((1, tile_t, S), lambda b, t: (b, t, 0)),           # src_mask rows (int8)
        pl.BlockSpec((1, n_heads, T, dh), lambda b, t: (b, 0, 0, 0)),   # self-attn K (bf16)
        pl.BlockSpec((1, n_heads, T, dh), lambda b, t: (b, 0, 0, 0)),   # self-attn V (bf16)
        pl.BlockSpec((1, n_heads, S, dh), lambda b, t: (b, 0, 0, 0)),   # cross-attn K (bf16)
        pl.BlockSpec((1, n_heads, S, dh), lambda b, t: (b, 0, 0, 0)),   # cross-attn V (bf16)
    ] + [_single_buffered_spec(w.shape, (lambda b, t, _nd=w.ndim: (0,) * _nd))
         for w in wlist]

    kernel = functools.partial(decoder_layer_kernel, n_heads=n_heads, inv_scale=inv_scale)
    return pl.pallas_call(
        kernel,
        out_shape=jax.ShapeDtypeStruct((B, T, H), trg.dtype),
        grid=(B, n_t),
        in_specs=in_specs,
        out_specs=pl.BlockSpec((1, tile_t, H), lambda b, t: (b, t, 0)),
        compiler_params=pltpu.CompilerParams(
            dimension_semantics=("parallel", "parallel"),
            vmem_limit_bytes=_vmem_limit_bytes(),
        ),
    )(trg, tmask, smask, k_sa, v_sa, k_ea, v_ea, *wlist)


# ------------------------- pure-JAX reference (check) --------------------------

def ref_decoder_layer(trg, src, tmask, smask, PP, n_heads):
    """Pure-JAX reference mirroring the kernel numerics (bf16 matmul inputs, f32 accumulation,
    additive -1e30 mask bias).  Dropout is identity at inference."""
    H = trg.shape[-1]
    dh = H // n_heads
    inv_scale = 1.0 / math.sqrt(dh)

    def mm(x, w):
        return jnp.einsum('...k,kn->...n', x.astype(jnp.bfloat16), w,
                          preferred_element_type=jnp.float32)

    def ln(x):
        mu = x.mean(-1, keepdims=True)
        var = ((x - mu) ** 2).mean(-1, keepdims=True)
        return (x - mu) * jax.lax.rsqrt(var + 1e-5) * PP['ln_g'][0] + PP['ln_b'][0]

    def attn(xq, xkv, mask, pre):
        B, Lq, _ = xq.shape
        Lk = xkv.shape[1]
        q = (mm(xq, PP[pre + '_wq']) + PP[pre + '_bq'][0]) * inv_scale
        kv = mm(xkv, PP[pre + '_wkv']) + PP[pre + '_bkv'][0]
        k, v = kv[..., :H], kv[..., H:]
        qh = q.reshape(B, Lq, n_heads, dh).transpose(0, 2, 1, 3)
        kh = k.reshape(B, Lk, n_heads, dh).transpose(0, 2, 1, 3)
        vh = v.reshape(B, Lk, n_heads, dh).transpose(0, 2, 1, 3)
        s = jnp.einsum('bhqd,bhkd->bhqk', qh.astype(jnp.bfloat16), kh.astype(jnp.bfloat16),
                       preferred_element_type=jnp.float32)
        s = s + jnp.where(mask[:, None] == 0, -1e30, 0.0)
        a = jax.nn.softmax(s, axis=-1)
        ctx = jnp.einsum('bhqk,bhkd->bhqd', a.astype(jnp.bfloat16), vh.astype(jnp.bfloat16),
                         preferred_element_type=jnp.float32)
        ctx = ctx.transpose(0, 2, 1, 3).reshape(B, Lq, H)
        return mm(ctx, PP[pre + '_wo']) + PP[pre + '_bo'][0]

    x = ln(trg + attn(trg, trg, tmask, 'sa'))
    x = ln(x + attn(x, src, smask, 'ea'))
    h1 = jnp.maximum(mm(x, PP['pf_w1']) + PP['pf_b1'][0], 0.0)
    ff = mm(h1, PP['pf_w2']) + PP['pf_b2'][0]
    return ln(x + ff)


# ----------------------------------- params ------------------------------------

def init_params(key, hid_dim, pf_dim):
    """PyTorch-equivalent parameters, stored pre-transposed as (in, out)."""
    P = {}
    k = key

    def lin(k, din, dout):
        kw, kb = jax.random.split(k)
        w = jax.random.normal(kw, (din, dout), jnp.float32) * 0.05
        b = jax.random.normal(kb, (1, dout), jnp.float32) * 0.05
        return w, b

    for pre in ('sa', 'ea'):
        for name in ('q', 'k', 'v', 'o'):
            k, sub = jax.random.split(k)
            w, b = lin(sub, hid_dim, hid_dim)
            P[f'{pre}_w{name}'] = w
            P[f'{pre}_b{name}'] = b
    k, sub = jax.random.split(k)
    P['pf_w1'], P['pf_b1'] = lin(sub, hid_dim, pf_dim)
    k, sub = jax.random.split(k)
    P['pf_w2'], P['pf_b2'] = lin(sub, pf_dim, hid_dim)
    P['ln_g'] = jnp.ones((1, hid_dim), jnp.float32)
    P['ln_b'] = jnp.zeros((1, hid_dim), jnp.float32)
    return P


def pack_params(P):
    """Pack into the fused/bf16 layout the kernels consume.  Mathematically equivalent to the
    original module: K|V weights are concatenated along the output dim; matmul weights cast to
    bf16 (biases / LayerNorm params stay f32)."""
    w = lambda x: x.astype(jnp.bfloat16)
    PP = {}
    for pre in ('sa', 'ea'):
        PP[f'{pre}_wq'] = w(P[f'{pre}_wq'])
        PP[f'{pre}_bq'] = P[f'{pre}_bq']
        PP[f'{pre}_wkv'] = w(jnp.concatenate([P[f'{pre}_wk'], P[f'{pre}_wv']], axis=1))
        PP[f'{pre}_bkv'] = jnp.concatenate([P[f'{pre}_bk'], P[f'{pre}_bv']], axis=1)
        PP[f'{pre}_wo'] = w(P[f'{pre}_wo'])
        PP[f'{pre}_bo'] = P[f'{pre}_bo']
    PP['pf_w1'], PP['pf_b1'] = w(P['pf_w1']), P['pf_b1']
    PP['pf_w2'], PP['pf_b2'] = w(P['pf_w2']), P['pf_b2']
    PP['ln_g'], PP['ln_b'] = P['ln_g'], P['ln_b']
    return PP


# ------------------------------------ main --------------------------------------

if __name__ == "__main__":
    B, T, S = 2, 64, 64
    hid_dim, n_heads, pf_dim = 64, 4, 128
    TILE_T = 32                                  # grid (2, 2): exercises the T-tiled path

    key = jax.random.PRNGKey(0)
    k_trg, k_src, k_par = jax.random.split(key, 3)

    trg = jax.random.normal(k_trg, (B, T, hid_dim), jnp.float32)
    src = jax.random.normal(k_src, (B, S, hid_dim), jnp.float32)

    # causal target mask, full source mask (1 = attend, 0 = masked)
    trg_mask = jnp.broadcast_to(jnp.tril(jnp.ones((T, T), jnp.float32)), (B, T, T))
    src_mask = jnp.ones((B, T, S), jnp.float32)

    P = init_params(k_par, hid_dim, pf_dim)
    PP = pack_params(P)

    out = decoder_layer(trg, src, trg_mask, src_mask, PP, n_heads, tile_t=TILE_T)
    out = jax.block_until_ready(out)

    ref = jax.block_until_ready(ref_decoder_layer(trg, src, trg_mask, src_mask, PP, n_heads))
    assert out.shape == (B, T, hid_dim)
    max_err = float(jnp.max(jnp.abs(out - ref)))
    assert jnp.allclose(out, ref, rtol=2e-2, atol=1e-2), \
        f"mismatch vs pure-JAX reference (max abs err {max_err})"

    print("KERNEL_OK")
</pallas_src>

<mosaic_0001>
module attributes {stable_mosaic.version = 11 : i64} {
  func.func @kv_project_kernel(%arg0: i32, %arg1: memref<1x64x64xf32, #tpu.memory_space<vmem>>, %arg2: memref<64x128xbf16, #tpu.memory_space<vmem>>, %arg3: memref<1x128xf32, #tpu.memory_space<vmem>>, %arg4: memref<1x4x64x16xbf16, #tpu.memory_space<vmem>>, %arg5: memref<1x4x64x16xbf16, #tpu.memory_space<vmem>>) attributes {dimension_semantics = [#tpu.dimension_semantics<parallel>], iteration_bounds = array<i64: 2>, scalar_prefetch = 0 : i64, scratch_operands = 0 : i64, tpu.core_type = #tpu.core_type<tc>, window_params = [{transform_indices = @transform_0, window_bounds = array<i64: 1, 64, 64>}, {pipeline_mode = #tpu.pipeline_mode<synchronous>, transform_indices = @transform_1, window_bounds = array<i64: 64, 128>}, {pipeline_mode = #tpu.pipeline_mode<synchronous>, transform_indices = @transform_2, window_bounds = array<i64: 1, 128>}, {transform_indices = @transform_3, window_bounds = array<i64: 1, 4, 64, 16>}, {transform_indices = @transform_4, window_bounds = array<i64: 1, 4, 64, 16>}]} {
    %c0 = arith.constant 0 : index
    %c0_0 = arith.constant 0 : index
    %c0_1 = arith.constant 0 : index
    %0 = vector.load %arg1[%c0, %c0_0, %c0_1] : memref<1x64x64xf32, #tpu.memory_space<vmem>>, vector<1x64x64xf32>
    %1 = vector.shape_cast %0 : vector<1x64x64xf32> to vector<64x64xf32>
    %c0_2 = arith.constant 0 : index
    %c0_3 = arith.constant 0 : index
    %2 = vector.load %arg2[%c0_2, %c0_3] : memref<64x128xbf16, #tpu.memory_space<vmem>>, vector<64x128xbf16>
    %3 = arith.truncf %1 : vector<64x64xf32> to vector<64x64xbf16>
    %cst = arith.constant dense<0.000000e+00> : vector<64x128xf32>
    %4 = tpu.matmul %3, %2, %cst {dimension_numbers = #tpu.dot_dimension_numbers<[1], [0], [0], [1], [0, 0, 1, 1], [], []>} : vector<64x64xbf16>, vector<64x128xbf16>, vector<64x128xf32> -> vector<64x128xf32>
    %c0_4 = arith.constant 0 : index
    %c0_5 = arith.constant 0 : index
    %5 = vector.load %arg3[%c0_4, %c0_5] : memref<1x128xf32, #tpu.memory_space<vmem>>, vector<1x128xf32>
    %6 = vector.broadcast %5 : vector<1x128xf32> to vector<64x128xf32>
    %7 = arith.addf %4, %6 : vector<64x128xf32>
    %8 = vector.extract_strided_slice %7 {offsets = [0, 0], sizes = [64, 16], strides = [1, 1]} : vector<64x128xf32> to vector<64x16xf32>
    %9 = arith.truncf %8 : vector<64x16xf32> to vector<64x16xbf16>
    %c0_6 = arith.constant 0 : index
    %c0_7 = arith.constant 0 : index
    %c0_8 = arith.constant 0 : index
    %c0_9 = arith.constant 0 : index
    %10 = vector.load %arg4[%c0_6, %c0_7, %c0_8, %c0_9] : memref<1x4x64x16xbf16, #tpu.memory_space<vmem>>, vector<1x1x64x16xbf16>
    %11 = vector.shape_cast %10 : vector<1x1x64x16xbf16> to vector<64x16xbf16>
    %12 = vector.shape_cast %9 : vector<64x16xbf16> to vector<1x1x64x16xbf16>
    tpu.vector_store %arg4[%c0_6, %c0_7, %c0_8, %c0_9], %12 {strides = array<i32>} : memref<1x4x64x16xbf16, #tpu.memory_space<vmem>>, vector<1x1x64x16xbf16>,
    %13 = vector.extract_strided_slice %7 {offsets = [0, 64], sizes = [64, 16], strides = [1, 1]} : vector<64x128xf32> to vector<64x16xf32>
    %14 = arith.truncf %13 : vector<64x16xf32> to vector<64x16xbf16>
    %c0_10 = arith.constant 0 : index
    %c0_11 = arith.constant 0 : index
    %c0_12 = arith.constant 0 : index
    %c0_13 = arith.constant 0 : index
    %15 = vector.load %arg5[%c0_10, %c0_11, %c0_12, %c0_13] : memref<1x4x64x16xbf16, #tpu.memory_space<vmem>>, vector<1x1x64x16xbf16>
    %16 = vector.shape_cast %15 : vector<1x1x64x16xbf16> to vector<64x16xbf16>
    %17 = vector.shape_cast %14 : vector<64x16xbf16> to vector<1x1x64x16xbf16>
    tpu.vector_store %arg5[%c0_10, %c0_11, %c0_12, %c0_13], %17 {strides = array<i32>} : memref<1x4x64x16xbf16, #tpu.memory_space<vmem>>, vector<1x1x64x16xbf16>,
    %18 = vector.extract_strided_slice %7 {offsets = [0, 16], sizes = [64, 16], strides = [1, 1]} : vector<64x128xf32> to vector<64x16xf32>
    %19 = arith.truncf %18 : vector<64x16xf32> to vector<64x16xbf16>
    %c0_14 = arith.constant 0 : index
    %c1 = arith.constant 1 : index
    %c0_15 = arith.constant 0 : index
    %c0_16 = arith.constant 0 : index
    %20 = vector.load %arg4[%c0_14, %c1, %c0_15, %c0_16] : memref<1x4x64x16xbf16, #tpu.memory_space<vmem>>, vector<1x1x64x16xbf16>
    %21 = vector.shape_cast %20 : vector<1x1x64x16xbf16> to vector<64x16xbf16>
    %22 = vector.shape_cast %19 : vector<64x16xbf16> to vector<1x1x64x16xbf16>
    tpu.vector_store %arg4[%c0_14, %c1, %c0_15, %c0_16], %22 {strides = array<i32>} : memref<1x4x64x16xbf16, #tpu.memory_space<vmem>>, vector<1x1x64x16xbf16>,
    %23 = vector.extract_strided_slice %7 {offsets = [0, 80], sizes = [64, 16], strides = [1, 1]} : vector<64x128xf32> to vector<64x16xf32>
    %24 = arith.truncf %23 : vector<64x16xf32> to vector<64x16xbf16>
    %c0_17 = arith.constant 0 : index
    %c1_18 = arith.constant 1 : index
    %c0_19 = arith.constant 0 : index
    %c0_20 = arith.constant 0 : index
    %25 = vector.load %arg5[%c0_17, %c1_18, %c0_19, %c0_20] : memref<1x4x64x16xbf16, #tpu.memory_space<vmem>>, vector<1x1x64x16xbf16>
    %26 = vector.shape_cast %25 : vector<1x1x64x16xbf16> to vector<64x16xbf16>
    %27 = vector.shape_cast %24 : vector<64x16xbf16> to vector<1x1x64x16xbf16>
    tpu.vector_store %arg5[%c0_17, %c1_18, %c0_19, %c0_20], %27 {strides = array<i32>} : memref<1x4x64x16xbf16, #tpu.memory_space<vmem>>, vector<1x1x64x16xbf16>,
    %28 = vector.extract_strided_slice %7 {offsets = [0, 32], sizes = [64, 16], strides = [1, 1]} : vector<64x128xf32> to vector<64x16xf32>
    %29 = arith.truncf %28 : vector<64x16xf32> to vector<64x16xbf16>
    %c0_21 = arith.constant 0 : index
    %c2 = arith.constant 2 : index
    %c0_22 = arith.constant 0 : index
    %c0_23 = arith.constant 0 : index
    %30 = vector.load %arg4[%c0_21, %c2, %c0_22, %c0_23] : memref<1x4x64x16xbf16, #tpu.memory_space<vmem>>, vector<1x1x64x16xbf16>
    %31 = vector.shape_cast %30 : vector<1x1x64x16xbf16> to vector<64x16xbf16>
    %32 = vector.shape_cast %29 : vector<64x16xbf16> to vector<1x1x64x16xbf16>
    tpu.vector_store %arg4[%c0_21, %c2, %c0_22, %c0_23], %32 {strides = array<i32>} : memref<1x4x64x16xbf16, #tpu.memory_space<vmem>>, vector<1x1x64x16xbf16>,
    %33 = vector.extract_strided_slice %7 {offsets = [0, 96], sizes = [64, 16], strides = [1, 1]} : vector<64x128xf32> to vector<64x16xf32>
    %34 = arith.truncf %33 : vector<64x16xf32> to vector<64x16xbf16>
    %c0_24 = arith.constant 0 : index
    %c2_25 = arith.constant 2 : index
    %c0_26 = arith.constant 0 : index
    %c0_27 = arith.constant 0 : index
    %35 = vector.load %arg5[%c0_24, %c2_25, %c0_26, %c0_27] : memref<1x4x64x16xbf16, #tpu.memory_space<vmem>>, vector<1x1x64x16xbf16>
    %36 = vector.shape_cast %35 : vector<1x1x64x16xbf16> to vector<64x16xbf16>
    %37 = vector.shape_cast %34 : vector<64x16xbf16> to vector<1x1x64x16xbf16>
    tpu.vector_store %arg5[%c0_24, %c2_25, %c0_26, %c0_27], %37 {strides = array<i32>} : memref<1x4x64x16xbf16, #tpu.memory_space<vmem>>, vector<1x1x64x16xbf16>,
    %38 = vector.extract_strided_slice %7 {offsets = [0, 48], sizes = [64, 16], strides = [1, 1]} : vector<64x128xf32> to vector<64x16xf32>
    %39 = arith.truncf %38 : vector<64x16xf32> to vector<64x16xbf16>
    %c0_28 = arith.constant 0 : index
    %c3 = arith.constant 3 : index
    %c0_29 = arith.constant 0 : index
    %c0_30 = arith.constant 0 : index
    %40 = vector.load %arg4[%c0_28, %c3, %c0_29, %c0_30] : memref<1x4x64x16xbf16, #tpu.memory_space<vmem>>, vector<1x1x64x16xbf16>
    %41 = vector.shape_cast %40 : vector<1x1x64x16xbf16> to vector<64x16xbf16>
    %42 = vector.shape_cast %39 : vector<64x16xbf16> to vector<1x1x64x16xbf16>
    tpu.vector_store %arg4[%c0_28, %c3, %c0_29, %c0_30], %42 {strides = array<i32>} : memref<1x4x64x16xbf16, #tpu.memory_space<vmem>>, vector<1x1x64x16xbf16>,
    %43 = vector.extract_strided_slice %7 {offsets = [0, 112], sizes = [64, 16], strides = [1, 1]} : vector<64x128xf32> to vector<64x16xf32>
    %44 = arith.truncf %43 : vector<64x16xf32> to vector<64x16xbf16>
    %c0_31 = arith.constant 0 : index
    %c3_32 = arith.constant 3 : index
    %c0_33 = arith.constant 0 : index
    %c0_34 = arith.constant 0 : index
    %45 = vector.load %arg5[%c0_31, %c3_32, %c0_33, %c0_34] : memref<1x4x64x16xbf16, #tpu.memory_space<vmem>>, vector<1x1x64x16xbf16>
    %46 = vector.shape_cast %45 : vector<1x1x64x16xbf16> to vector<64x16xbf16>
    %47 = vector.shape_cast %44 : vector<64x16xbf16> to vector<1x1x64x16xbf16>
    tpu.vector_store %arg5[%c0_31, %c3_32, %c0_33, %c0_34], %47 {strides = array<i32>} : memref<1x4x64x16xbf16, #tpu.memory_space<vmem>>, vector<1x1x64x16xbf16>,
    return
  }
  func.func @transform_0(%arg0: i32) -> (i32, i32, i32) {
    %c0_i32 = arith.constant 0 : i32
    %c0_i32_0 = arith.constant 0 : i32
    %c0_i32_1 = arith.constant 0 : i32
    return %arg0, %c0_i32, %c0_i32_0 : i32, i32, i32
  }
  func.func @transform_1(%arg0: i32) -> (i32, i32) {
    %c0_i32 = arith.constant 0 : i32
    %c0_i32_0 = arith.constant 0 : i32
    %c0_i32_1 = arith.constant 0 : i32
    return %c0_i32, %c0_i32_0 : i32, i32
  }
  func.func @transform_2(%arg0: i32) -> (i32, i32) {
    %c0_i32 = arith.constant 0 : i32
    %c0_i32_0 = arith.constant 0 : i32
    %c0_i32_1 = arith.constant 0 : i32
    return %c0_i32, %c0_i32_0 : i32, i32
  }
  func.func @transform_3(%arg0: i32) -> (i32, i32, i32, i32) {
    %c0_i32 = arith.constant 0 : i32
    %c0_i32_0 = arith.constant 0 : i32
    %c0_i32_1 = arith.constant 0 : i32
    %c0_i32_2 = arith.constant 0 : i32
    return %arg0, %c0_i32, %c0_i32_0, %c0_i32_1 : i32, i32, i32, i32
  }
  func.func @transform_4(%arg0: i32) -> (i32, i32, i32, i32) {
    %c0_i32 = arith.constant 0 : i32
    %c0_i32_0 = arith.constant 0 : i32
    %c0_i32_1 = arith.constant 0 : i32
    %c0_i32_2 = arith.constant 0 : i32
    return %arg0, %c0_i32, %c0_i32_0, %c0_i32_1 : i32, i32, i32, i32
  }
}

</mosaic_0001>

<llo_original>
// kernel: tpu_custom_call.1
$region0: #{tpu_custom_call.1}
  #allocation0 [shape = 'u32[]', space=smem, size = 0x4, offset = 0x4, fixed_abs, tag = 'smem constant byte address 0x4 - core index']
  #allocation1 [shape = 'u32[144,128]{1,0:T(1,128)}', space=vmem, size = 0x12000, scoped, tag = 'internal scratch']
  %s0 = inlined_call_operand.hbm [shape: f32[2,64,64], index: 0, kind: input, shape index: {}]
  %s1 = inlined_call_operand.hbm [shape: bf16[64,128], index: 1, kind: input, shape index: {}]
  %s2 = inlined_call_operand.vmem [shape: f32[1,128], index: 2, kind: input, shape index: {}]
  %s3 = inlined_call_operand.vmem [shape: bf16[2,4,64,16], index: 3, kind: output, shape index: {0}]
  %s4 = inlined_call_operand.vmem [shape: bf16[2,4,64,16], index: 4, kind: output, shape index: {1}]
  %5 = xla_tuple %s3, %s4
  %s6 = sld [smem:[#allocation0]]
  $region61: #{tpu_custom_call.1} parent=0
    _
  %s8 = ssub.s32 1, %s6
  %s9 = scalar_select 0, %s8, %s6
  $region1: #{tpu_custom_call.1} parent=0
    #allocation2 [shape = 'u8[65536]{0}', space=vmem, size = 0x10000, scoped, tag = 'input window, operand 0']
    #allocation3 [shape = 's32[2]{0}', space=sflag, size = 0x8, scoped, tag = 'scoped memory for tpu_custom_call.1']
    #allocation4 [shape = 'u8[16384]{0}', space=vmem, size = 0x4000, scoped, tag = 'input window, operand 1, single buffered']
    #allocation5 [shape = 's32[1]{0}', space=sflag, size = 0x4, scoped, tag = 'scoped memory for tpu_custom_call.1']
    %10 = vsyncpa [#allocation3], 0
    %s11 = scalar_lea.sflag [#allocation3], 1
    %12 = vsyncpa %s11, 0
    %13 = vsyncpa [#allocation5], 0
    loop: start=0, step=1, limit=4
    $region2: #{tpu_custom_call.1} parent=1 // loop_pre_header
      _
    $region3: #{tpu_custom_call.1} parent=1 // loop_header
      %s15 = sphi 0, %s19
      %p16 = scmp.ge.s32.totalorder %s15, 4
      %s25 = sphi 0, %s27
      %s28 = sphi 0, %s25
      %s29 = sphi 0, %s28
      %s45 = sphi 0, %s29
      %s49 = sphi 0, %s49
      %s51 = sphi 0, %s49
      %s52 = sphi 0, %s51
      %s66 = sphi 0, %s52
      %s70 = sphi 0, %s70
      %s72 = sphi 0, %s70
      %s73 = sphi 0, %s72
      %s87 = sphi 0, %s73
      %s93 = sphi 0, %s95
      %s96 = sphi 0, %s93
      %s97 = sphi 0, %s96
      %s113 = sphi 0, %s97
      %s119 = sphi 0, %s121
      %s122 = sphi 0, %s119
      %s123 = sphi 0, %s122
      %s139 = sphi 0, %s123
    $region4: #{tpu_custom_call.1} parent=1 // loop_header_branch
      %18 = sbr.rel (%p16) target = $region8
    $region5: #{tpu_custom_call.1} parent=1 // loop_body
      %s20 = ssub.s32 %s15, 1
      %s21 = ssub.s32 %s15, 2
      %s22 = sadd.s32 %s15, 1
      %s23 = ssub.s32 %s15, %s22
      %p24 = scmp.eq.s32.totalorder %s23, 0
      %s26 = sadd.s32 %s25, 1
      %s27 = scalar_select %p24, %s25, %s26
      %p30 = pneg %p24
      %p31 = scmp.eq.s32.totalorder %s15, 1
      %p32 = por %p30, %p31
      %p33 = scmp.ne.s32.totalorder %s25, %s28
      %p34 = scmp.eq.s32.totalorder %s15, 0
      %p35 = por %p33, %p34
      %p36 = scmp.ne.s32.totalorder %s25, %s28
      %p37 = scmp.eq.s32.totalorder %s20, 1
      %p38 = por %p36, %p37
      %p39 = scmp.ne.s32.totalorder %s28, %s29
      %p40 = scmp.eq.s32.totalorder %s20, 0
      %p41 = por %p39, %p40
      %p42 = scmp.ne.s32.totalorder %s28, %s29
      %p43 = scmp.eq.s32.totalorder %s21, 1
      %p44 = por %p42, %p43
      %p46 = scmp.ne.s32.totalorder %s29, %s45
      %p47 = scmp.eq.s32.totalorder %s21, 0
      %p48 = por %p46, %p47
      %s50 = sadd.s32 %s49, 1
      %p53 = scmp.eq.s32.totalorder %s15, 1
      %p54 = scmp.ne.s32.totalorder %s49, %s51
      %p55 = scmp.eq.s32.totalorder %s15, 0
      %p56 = por %p54, %p55
      %p57 = scmp.ne.s32.totalorder %s49, %s51
      %p58 = scmp.eq.s32.totalorder %s20, 1
      %p59 = por %p57, %p58
      %p60 = scmp.ne.s32.totalorder %s51, %s52
      %p61 = scmp.eq.s32.totalorder %s20, 0
      %p62 = por %p60, %p61
      %p63 = scmp.ne.s32.totalorder %s51, %s52
      %p64 = scmp.eq.s32.totalorder %s21, 1
      %p65 = por %p63, %p64
      %p67 = scmp.ne.s32.totalorder %s52, %s66
      %p68 = scmp.eq.s32.totalorder %s21, 0
      %p69 = por %p67, %p68
      %s71 = sadd.s32 %s70, 1
      %p74 = scmp.eq.s32.totalorder %s15, 1
      %p75 = scmp.ne.s32.totalorder %s70, %s72
      %p76 = scmp.eq.s32.totalorder %s15, 0
      %p77 = por %p75, %p76
      %p78 = scmp.ne.s32.totalorder %s70, %s72
      %p79 = scmp.eq.s32.totalorder %s20, 1
      %p80 = por %p78, %p79
      %p81 = scmp.ne.s32.totalorder %s72, %s73
      %p82 = scmp.eq.s32.totalorder %s20, 0
      %p83 = por %p81, %p82
      %p84 = scmp.ne.s32.totalorder %s72, %s73
      %p85 = scmp.eq.s32.totalorder %s21, 1
      %p86 = por %p84, %p85
      %p88 = scmp.ne.s32.totalorder %s73, %s87
      %p89 = scmp.eq.s32.totalorder %s21, 0
      %p90 = por %p88, %p89
      %s91 = ssub.s32 %s15, %s22
      %p92 = scmp.eq.s32.totalorder %s91, 0
      %s94 = sadd.s32 %s93, 1
      %s95 = scalar_select %p92, %s93, %s94
      %p98 = pneg %p92
      %p99 = scmp.eq.s32.totalorder %s15, 1
      %p100 = por %p98, %p99
      %p101 = scmp.ne.s32.totalorder %s93, %s96
      %p102 = scmp.eq.s32.totalorder %s15, 0
      %p103 = por %p101, %p102
      %p104 = scmp.ne.s32.totalorder %s93, %s96
      %p105 = scmp.eq.s32.totalorder %s20, 1
      %p106 = por %p104, %p105
      %p107 = scmp.ne.s32.totalorder %s96, %s97
      %p108 = scmp.eq.s32.totalorder %s20, 0
      %p109 = por %p107, %p108
      %p110 = scmp.ne.s32.totalorder %s96, %s97
      %p111 = scmp.eq.s32.totalorder %s21, 1
      %p112 = por %p110, %p111
      %p114 = scmp.ne.s32.totalorder %s97, %s113
      %p115 = scmp.eq.s32.totalorder %s21, 0
      %p116 = por %p114, %p115
      %s117 = ssub.s32 %s15, %s22
      %p118 = scmp.eq.s32.totalorder %s117, 0
      %s120 = sadd.s32 %s119, 1
      %s121 = scalar_select %p118, %s119, %s120
      %p124 = pneg %p118
      %p125 = scmp.eq.s32.totalorder %s15, 1
      %p126 = por %p124, %p125
      %p127 = scmp.ne.s32.totalorder %s119, %s122
      %p128 = scmp.eq.s32.totalorder %s15, 0
      %p129 = por %p127, %p128
      %p130 = scmp.ne.s32.totalorder %s119, %s122
      %p131 = scmp.eq.s32.totalorder %s20, 1
      %p132 = por %p130, %p131
      %p133 = scmp.ne.s32.totalorder %s122, %s123
      %p134 = scmp.eq.s32.totalorder %s20, 0
      %p135 = por %p133, %p134
      %p136 = scmp.ne.s32.totalorder %s122, %s123
      %p137 = scmp.eq.s32.totalorder %s21, 1
      %p138 = por %p136, %p137
      %p140 = scmp.ne.s32.totalorder %s123, %s139
      %p141 = scmp.eq.s32.totalorder %s21, 0
      %p142 = por %p140, %p141
      %p143 = scmp.le.s32.totalorder 1, %s15
      %p144 = scmp.lt.s32.totalorder %s15, 3
      %p145 = pnand %p143, %p144
      %p146 = pneg %p145
      // Predicated region
      $region9: #{tpu_custom_call.1} parent=5 // pred_check
        _
      $region10: #{tpu_custom_call.1} parent=5 // pred_check_branch
        %148 = sbr.rel (%p145) target = $region12
      $region11: #{tpu_custom_call.1} parent=5 // pred_region
        %s149 = ssub.s32 %s15, 1
        // Predicated region
        $region13: #{tpu_custom_call.1} parent=11 // pred_check
          %p150 = pneg %p62
        $region14: #{tpu_custom_call.1} parent=11 // pred_check_branch
          %152 = sbr.rel (%p150) target = $region16
        $region15: #{tpu_custom_call.1} parent=11 // pred_region
          %s154 = ssub.s32 512, 512
          %155 = vsyncadd [#allocation5], %s154
          %s156 = sshll.u32 [#allocation4], 4
          %s157 = int_to_ptr.vmem [resolvable:$true] %s156
          %162 = dma.hbm_to_vmem [thread:$0]  %s1, 512, %s157, [#allocation5], 64, 64, 4
        $region16: #{tpu_custom_call.1} parent=11 // pred_fallthru
          _
        // Predicated region
        $region17: #{tpu_custom_call.1} parent=11 // pred_check
          %p163 = pneg %p83
        $region18: #{tpu_custom_call.1} parent=11 // pred_check_branch
          %165 = sbr.rel (%p163) target = $region20
        $region19: #{tpu_custom_call.1} parent=11 // pred_region
          _
        $region20: #{tpu_custom_call.1} parent=11 // pred_fallthru
          _
      $region12: #{tpu_custom_call.1} parent=5 // pred_fallthru
        _
      %p166 = scmp.lt.s32.totalorder %s15, 2
      // Predicated region
      $region21: #{tpu_custom_call.1} parent=5 // pred_check
        %p167 = pneg %p166
      $region22: #{tpu_custom_call.1} parent=5 // pred_check_branch
        %169 = sbr.rel (%p167) target = $region24
      $region23: #{tpu_custom_call.1} parent=5 // pred_region
        // Predicated region
        $region25: #{tpu_custom_call.1} parent=23 // pred_check
          %p170 = pneg %p35
        $region26: #{tpu_custom_call.1} parent=23 // pred_check_branch
          %172 = sbr.rel (%p170) target = $region28
        $region27: #{tpu_custom_call.1} parent=23 // pred_region
          %s173 = sand.u32 %s25, 1
          %s174 = scalar_lea.sflag [#allocation3], %s173
          %s175 = sand.u32 %s25, 1
          %s176 = smul.addr %s175, 64
          %s177 = scalar_lea.vmem [#allocation2], %s176
          %s179 = ssub.s32 1024, 1024
          %180 = vsyncadd %s174, %s179
          %s181 = smul.addr %s15, 8
          %s182 = smul.addr %s181, 128
          %s183 = scalar_lea.hbm %s0, %s182
          %s184 = sshll.u32 %s177, 4
          %s185 = int_to_ptr.vmem [resolvable:$true] %s184
          %190 = dma.hbm_to_vmem [thread:$0]  %s183, 1024, %s185, %s174, 128, 128, 8
        $region28: #{tpu_custom_call.1} parent=23 // pred_fallthru
          _
      $region24: #{tpu_custom_call.1} parent=5 // pred_fallthru
        _
      %p191 = scmp.le.s32.totalorder 1, %s15
      %p192 = scmp.lt.s32.totalorder %s15, 3
      %p193 = pnand %p191, %p192
      %p194 = pneg %p193
      // Predicated region
      $region29: #{tpu_custom_call.1} parent=5 // pred_check
        _
      $region30: #{tpu_custom_call.1} parent=5 // pred_check_branch
        %196 = sbr.rel (%p193) target = $region32
      $region31: #{tpu_custom_call.1} parent=5 // pred_region
        %s197 = ssub.s32 %s15, 1
        %s198 = sand.u32 %s28, 1
        %s199 = scalar_lea.sflag [#allocation3], %s198
        %s200 = sand.u32 %s28, 1
        %s201 = smul.addr %s200, 64
        %s202 = scalar_lea.vmem [#allocation2], %s201
        // Predicated region
        $region33: #{tpu_custom_call.1} parent=31 // pred_check
          %p203 = pneg %p41
        $region34: #{tpu_custom_call.1} parent=31 // pred_check_branch
          %205 = sbr.rel (%p203) target = $region36
        $region35: #{tpu_custom_call.1} parent=31 // pred_region
          %206 = dma.done %s199, 1024
        $region36: #{tpu_custom_call.1} parent=31 // pred_fallthru
          _
        // Predicated region
        $region37: #{tpu_custom_call.1} parent=31 // pred_check
          %p207 = pneg %p62
        $region38: #{tpu_custom_call.1} parent=31 // pred_check_branch
          %209 = sbr.rel (%p207) target = $region40
        $region39: #{tpu_custom_call.1} parent=31 // pred_region
          %210 = dma.done [#allocation5], 512
        $region40: #{tpu_custom_call.1} parent=31 // pred_fallthru
          _
        %s211 = sand.u32 %s28, 1
        %s212 = scalar_lea.sflag [#allocation3], %s211
        %s213 = sand.u32 %s28, 1
        %s214 = smul.addr %s213, 64
        %s215 = scalar_lea.vmem [#allocation2], %s214
        %p216 = pneg %p41
        %p217 = pneg %p38
        %p218 = pneg %p62
        %p219 = pneg %p59
        %p220 = pneg %p83
        %p221 = pneg %p80
        %p222 = pneg %p109
        %p223 = pneg %p106
        %p224 = scmp.lt.s32.totalorder %s20, 1
        %s225 = scalar_select %p224, %s20, 1
        %s226 = smul.addr %s225, 32
        %s227 = smul.addr %s226, 4
        %s228 = scalar_lea.vmem %s3, %s227
        %p229 = pneg %p135
        %p230 = pneg %p132
        %p231 = scmp.lt.s32.totalorder %s20, 1
        %s232 = scalar_select %p231, %s20, 1
        %s233 = smul.addr %s232, 32
        %s234 = smul.addr %s233, 4
        %s235 = scalar_lea.vmem %s4, %s234
        %p236 = scmp.lt.s32.totalorder %s20, 1
        %s237 = scalar_select %p236, %s20, 1
        %s238 = smul.addr %s237, 32
        %s239 = smul.addr %s238, 4
        %s240 = scalar_lea.vmem %s3, %s239
        %p241 = scmp.lt.s32.totalorder %s20, 1
        %s242 = scalar_select %p241, %s20, 1
        %s243 = smul.addr %s242, 32
        %s244 = smul.addr %s243, 4
        %s245 = scalar_lea.vmem %s4, %s244
        %v247 = vld [vmem:[%s202] sm:$0xff]
        %v248 = vld [vmem:[%s202 + $0x8] sm:$0xff]
        %v249 = vld [vmem:[%s202 + $0x10] sm:$0xff]
        %v250 = vld [vmem:[%s202 + $0x18] sm:$0xff]
        %v251 = vld [vmem:[%s202 + $0x20] sm:$0xff]
        %v252 = vld [vmem:[%s202 + $0x28] sm:$0xff]
        %v253 = vld [vmem:[%s202 + $0x30] sm:$0xff]
        %v254 = vld [vmem:[%s202 + $0x38] sm:$0xff]
        %v255 = vld [vmem:[#allocation4] sm:$0xf]
        %v256 = vld [vmem:[#allocation4 + $0x4] sm:$0xf]
        %v257 = vld [vmem:[#allocation4 + $0x8] sm:$0xf]
        %v258 = vld [vmem:[#allocation4 + $0xc] sm:$0xf]
        %v259 = vld [vmem:[#allocation4 + $0x10] sm:$0xf]
        %v260 = vld [vmem:[#allocation4 + $0x14] sm:$0xf]
        %v261 = vld [vmem:[#allocation4 + $0x18] sm:$0xf]
        %v262 = vld [vmem:[#allocation4 + $0x1c] sm:$0xf]
        %v263 = vpack.c.bf16 %v248, %v247
        %v264 = vpack.c.bf16 %v250, %v249
        %v265 = vpack.c.bf16 %v252, %v251
        %v266 = vpack.c.bf16 %v254, %v253
        %v267 = vld [vmem:[%s2] sm:$0x1]
        %v269 = vlaneseq
        %v270 = vshrl.u32 %v269, 7
        %v271 = vsub.s32 0, %v270
        %v272 = vrot.slane %v267, %v271
        %v282 = vunpack.c.l.b16 %v255
        %v283 = vunpack.c.l.b16 %v256
        %v284 = vunpack.c.l.b16 %v257
        %v285 = vunpack.c.l.b16 %v258
        %v286 = vunpack.c.l.b16 %v259
        %v287 = vunpack.c.l.b16 %v260
        %v288 = vunpack.c.l.b16 %v261
        %v289 = vunpack.c.l.b16 %v262
        %v290 = vpack.c.b16 %v283, %v282
        %v291 = vpack.c.b16 %v285, %v284
        %v292 = vpack.c.b16 %v287, %v286
        %v293 = vpack.c.b16 %v289, %v288
        %vm298 = vcmask 523264
        %v300 = vsel %vm298, %v263, 0
        %v303 = vsel %vm298, %v264, 0
        %v306 = vsel %vm298, %v265, 0
        %v309 = vsel %vm298, %v266, 0
        %311 = vmatprep.subr.bf16.mxu0 0
        %312 = vmatpush1.bf16.msra.mxu0 0
        %313 = vmatprep.subr.bf16.mxu0 0
        %314 = vmatpush1.bf16.msra.mxu0 0
        %315 = vmatprep.subr.bf16.mxu0 0
        %316 = vmatpush1.bf16.msra.mxu0 0
        %317 = vmatprep.subr.bf16.mxu0 0
        %318 = vmatpush1.bf16.msra.mxu0 0
        %319 = vmatprep.subr.bf16.mxu0 0
        %320 = vmatpush1.bf16.msra.mxu0 %v293
        %321 = vmatprep.subr.bf16.mxu0 0
        %322 = vmatpush1.bf16.msra.mxu0 %v292
        %323 = vmatprep.subr.bf16.mxu0 0
        %324 = vmatpush1.bf16.msra.mxu0 %v291
        %325 = vmatprep.subr.bf16.mxu0 0
        %326 = vmatpush1.bf16.msra.mxu0 %v290
        %327 = vmatprep.subr.bf16.mxu0 0
        %328 = vmatpush2.bf16.msra.mxu0 0
        %329 = vmatprep.subr.bf16.mxu0 0
        %330 = vmatpush2.bf16.msra.mxu0 0
        %331 = vmatprep.subr.bf16.mxu0 0
        %332 = vmatpush2.bf16.msra.mxu0 0
        %333 = vmatprep.subr.bf16.mxu0 0
        %334 = vmatpush2.bf16.msra.mxu0 0
        %335 = vmatprep.subr.bf16.mxu0 0
        %336 = vmatpush2.bf16.msra.mxu0 0
        %337 = vmatprep.subr.bf16.mxu0 0
        %338 = vmatpush2.bf16.msra.mxu0 0
        %339 = vmatprep.subr.bf16.mxu0 0
        %340 = vmatpush2.bf16.msra.mxu0 0
        %341 = vmatprep.subr.bf16.mxu0 0
        %342 = vmatpush2.bf16.msra.mxu0 0
        %343 = vmatprep.mubr.bf16.mxu0 0
        %344 = vmatmul.mubr.bf16.gmra.mxu0 %v300
        %v345 = vpop.f32.mrf.mxu0
        %v346 = vadd.f32 %v272, %v345
        %v347 = vpop.f32.mrf.mxu0
        %v348 = vpop.f32.mrf.mxu0
        %v349 = vadd.f32 %v272, %v348
        %v350 = vpop.f32.mrf.mxu0
        %351 = vmatprep.mubr.bf16.mxu0 0
        %352 = vmatmul.mubr.bf16.gmra.mxu0 %v303
        %v353 = vpop.f32.mrf.mxu0
        %v354 = vadd.f32 %v272, %v353
        %v355 = vpop.f32.mrf.mxu0
        %v356 = vpop.f32.mrf.mxu0
        %v357 = vadd.f32 %v272, %v356
        %v358 = vpop.f32.mrf.mxu0
        %359 = vmatprep.mubr.bf16.mxu0 0
        %360 = vmatmul.mubr.bf16.gmra.mxu0 %v306
        %v361 = vpop.f32.mrf.mxu0
        %v362 = vadd.f32 %v272, %v361
        %v363 = vpop.f32.mrf.mxu0
        %v364 = vpop.f32.mrf.mxu0
        %v365 = vadd.f32 %v272, %v364
        %v366 = vpop.f32.mrf.mxu0
        %367 = vmatprep.mubr.bf16.mxu0 0
        %368 = vmatmul.mubr.bf16.gmra.mxu0 %v309
        %v369 = vpop.f32.mrf.mxu0
        %v370 = vadd.f32 %v272, %v369
        %v371 = vpop.f32.mrf.mxu0
        %v372 = vpop.f32.mrf.mxu0
        %v373 = vadd.f32 %v272, %v372
        %v374 = vpop.f32.mrf.mxu0
        %375 = vdwg.mxu0
        %v376 = vpack.c.bf16 %v349, %v346
        %v377 = vpack.c.bf16 %v357, %v354
        %v378 = vpack.c.bf16 %v365, %v362
        %v379 = vpack.c.bf16 %v373, %v370
        %v384 = vunpack.c.l.b16 %v376
        %v385 = vunpack.c.h.b16 %v376
        %v386 = vunpack.c.l.b16 %v377
        %v387 = vunpack.c.h.b16 %v377
        %v388 = vunpack.c.l.b16 %v378
        %v389 = vunpack.c.h.b16 %v378
        %v390 = vunpack.c.l.b16 %v379
        %v391 = vunpack.c.h.b16 %v379
        %v392 = vpack.c.b16 %v384, %v384
        %v393 = vpack.c.b16 %v385, %v385
        %v394 = vpack.c.b16 %v386, %v386
        %v395 = vpack.c.b16 %v387, %v387
        %v396 = vpack.c.b16 %v388, %v388
        %v397 = vpack.c.b16 %v389, %v389
        %v398 = vpack.c.b16 %v390, %v390
        %v399 = vpack.c.b16 %v391, %v391
        %vm408 = vcmask 125952
        %409 = vst.msk [vmem:[%s240] sm:$0xf] %vm408, %v392
        %410 = vst.msk [vmem:[%s240 + $0x4] sm:$0xf] %vm408, %v393
        %411 = vst.msk [vmem:[%s240 + $0x8] sm:$0xf] %vm408, %v394
        %412 = vst.msk [vmem:[%s240 + $0xc] sm:$0xf] %vm408, %v395
        %413 = vst.msk [vmem:[%s240 + $0x10] sm:$0xf] %vm408, %v396
        %414 = vst.msk [vmem:[%s240 + $0x14] sm:$0xf] %vm408, %v397
        %415 = vst.msk [vmem:[%s240 + $0x18] sm:$0xf] %vm408, %v398
        %416 = vst.msk [vmem:[%s240 + $0x1c] sm:$0xf] %vm408, %v399
        %417 = vrot.lane.b32.xlu0 %v392, 64
        %v418 = vpop.permute.xlu0 %417
        %419 = vrot.lane.b32.xlu0 %v393, 64
        %v420 = vpop.permute.xlu0 %419
        %421 = vrot.lane.b32.xlu0 %v394, 64
        %v422 = vpop.permute.xlu0 %421
        %423 = vrot.lane.b32.xlu0 %v395, 64
        %v424 = vpop.permute.xlu0 %423
        %425 = vrot.lane.b32.xlu0 %v396, 64
        %v426 = vpop.permute.xlu0 %425
        %427 = vrot.lane.b32.xlu0 %v397, 64
        %v428 = vpop.permute.xlu0 %427
        %429 = vrot.lane.b32.xlu0 %v398, 64
        %v430 = vpop.permute.xlu0 %429
        %431 = vrot.lane.b32.xlu0 %v399, 64
        %v432 = vpop.permute.xlu0 %431
        %441 = vst.msk [vmem:[%s245] sm:$0xf] %vm408, %v418
        %442 = vst.msk [vmem:[%s245 + $0x4] sm:$0xf] %vm408, %v420
        %443 = vst.msk [vmem:[%s245 + $0x8] sm:$0xf] %vm408, %v422
        %444 = vst.msk [vmem:[%s245 + $0xc] sm:$0xf] %vm408, %v424
        %445 = vst.msk [vmem:[%s245 + $0x10] sm:$0xf] %vm408, %v426
        %446 = vst.msk [vmem:[%s245 + $0x14] sm:$0xf] %vm408, %v428
        %447 = vst.msk [vmem:[%s245 + $0x18] sm:$0xf] %vm408, %v430
        %448 = vst.msk [vmem:[%s245 + $0x1c] sm:$0xf] %vm408, %v432
        %449 = vrot.lane.b32.xlu0 %v392, 112
        %v450 = vpop.permute.xlu0 %449
        %451 = vrot.lane.b32.xlu0 %v393, 112
        %v452 = vpop.permute.xlu0 %451
        %453 = vrot.lane.b32.xlu0 %v394, 112
        %v454 = vpop.permute.xlu0 %453
        %455 = vrot.lane.b32.xlu0 %v395, 112
        %v456 = vpop.permute.xlu0 %455
        %457 = vrot.lane.b32.xlu0 %v396, 112
        %v458 = vpop.permute.xlu0 %457
        %459 = vrot.lane.b32.xlu0 %v397, 112
        %v460 = vpop.permute.xlu0 %459
        %461 = vrot.lane.b32.xlu0 %v398, 112
        %v462 = vpop.permute.xlu0 %461
        %463 = vrot.lane.b32.xlu0 %v399, 112
        %v464 = vpop.permute.xlu0 %463
        %s473 = scalar_lea.vmem %s240, 32
        %474 = vst.msk [vmem:[%s473] sm:$0xf] %vm408, %v450
        %475 = vst.msk [vmem:[%s473 + $0x4] sm:$0xf] %vm408, %v452
        %476 = vst.msk [vmem:[%s473 + $0x8] sm:$0xf] %vm408, %v454
        %477 = vst.msk [vmem:[%s473 + $0xc] sm:$0xf] %vm408, %v456
        %478 = vst.msk [vmem:[%s473 + $0x10] sm:$0xf] %vm408, %v458
        %479 = vst.msk [vmem:[%s473 + $0x14] sm:$0xf] %vm408, %v460
        %480 = vst.msk [vmem:[%s473 + $0x18] sm:$0xf] %vm408, %v462
        %481 = vst.msk [vmem:[%s473 + $0x1c] sm:$0xf] %vm408, %v464
        %482 = vrot.lane.b32.xlu0 %v392, 48
        %v483 = vpop.permute.xlu0 %482
        %484 = vrot.lane.b32.xlu0 %v393, 48
        %v485 = vpop.permute.xlu0 %484
        %486 = vrot.lane.b32.xlu0 %v394, 48
        %v487 = vpop.permute.xlu0 %486
        %488 = vrot.lane.b32.xlu0 %v395, 48
        %v489 = vpop.permute.xlu0 %488
        %490 = vrot.lane.b32.xlu0 %v396, 48
        %v491 = vpop.permute.xlu0 %490
        %492 = vrot.lane.b32.xlu0 %v397, 48
        %v493 = vpop.permute.xlu0 %492
        %494 = vrot.lane.b32.xlu0 %v398, 48
        %v495 = vpop.permute.xlu0 %494
        %496 = vrot.lane.b32.xlu0 %v399, 48
        %v497 = vpop.permute.xlu0 %496
        %s506 = scalar_lea.vmem %s245, 32
        %507 = vst.msk [vmem:[%s506] sm:$0xf] %vm408, %v483
        %508 = vst.msk [vmem:[%s506 + $0x4] sm:$0xf] %vm408, %v485
        %509 = vst.msk [vmem:[%s506 + $0x8] sm:$0xf] %vm408, %v487
        %510 = vst.msk [vmem:[%s506 + $0xc] sm:$0xf] %vm408, %v489
        %511 = vst.msk [vmem:[%s506 + $0x10] sm:$0xf] %vm408, %v491
        %512 = vst.msk [vmem:[%s506 + $0x14] sm:$0xf] %vm408, %v493
        %513 = vst.msk [vmem:[%s506 + $0x18] sm:$0xf] %vm408, %v495
        %514 = vst.msk [vmem:[%s506 + $0x1c] sm:$0xf] %vm408, %v497
        %515 = vrot.lane.b32.xlu0 %v392, 96
        %v516 = vpop.permute.xlu0 %515
        %517 = vrot.lane.b32.xlu0 %v393, 96
        %v518 = vpop.permute.xlu0 %517
        %519 = vrot.lane.b32.xlu0 %v394, 96
        %v520 = vpop.permute.xlu0 %519
        %521 = vrot.lane.b32.xlu0 %v395, 96
        %v522 = vpop.permute.xlu0 %521
        %523 = vrot.lane.b32.xlu0 %v396, 96
        %v524 = vpop.permute.xlu0 %523
        %525 = vrot.lane.b32.xlu0 %v397, 96
        %v526 = vpop.permute.xlu0 %525
        %527 = vrot.lane.b32.xlu0 %v398, 96
        %v528 = vpop.permute.xlu0 %527
        %529 = vrot.lane.b32.xlu0 %v399, 96
        %v530 = vpop.permute.xlu0 %529
        %s539 = scalar_lea.vmem %s240, 64
        %540 = vst.msk [vmem:[%s539] sm:$0xf] %vm408, %v516
        %541 = vst.msk [vmem:[%s539 + $0x4] sm:$0xf] %vm408, %v518
        %542 = vst.msk [vmem:[%s539 + $0x8] sm:$0xf] %vm408, %v520
        %543 = vst.msk [vmem:[%s539 + $0xc] sm:$0xf] %vm408, %v522
        %544 = vst.msk [vmem:[%s539 + $0x10] sm:$0xf] %vm408, %v524
        %545 = vst.msk [vmem:[%s539 + $0x14] sm:$0xf] %vm408, %v526
        %546 = vst.msk [vmem:[%s539 + $0x18] sm:$0xf] %vm408, %v528
        %547 = vst.msk [vmem:[%s539 + $0x1c] sm:$0xf] %vm408, %v530
        %548 = vrot.lane.b32.xlu0 %v392, 32
        %v549 = vpop.permute.xlu0 %548
        %550 = vrot.lane.b32.xlu0 %v393, 32
        %v551 = vpop.permute.xlu0 %550
        %552 = vrot.lane.b32.xlu0 %v394, 32
        %v553 = vpop.permute.xlu0 %552
        %554 = vrot.lane.b32.xlu0 %v395, 32
        %v555 = vpop.permute.xlu0 %554
        %556 = vrot.lane.b32.xlu0 %v396, 32
        %v557 = vpop.permute.xlu0 %556
        %558 = vrot.lane.b32.xlu0 %v397, 32
        %v559 = vpop.permute.xlu0 %558
        %560 = vrot.lane.b32.xlu0 %v398, 32
        %v561 = vpop.permute.xlu0 %560
        %562 = vrot.lane.b32.xlu0 %v399, 32
        %v563 = vpop.permute.xlu0 %562
        %s572 = scalar_lea.vmem %s245, 64
        %573 = vst.msk [vmem:[%s572] sm:$0xf] %vm408, %v549
        %574 = vst.msk [vmem:[%s572 + $0x4] sm:$0xf] %vm408, %v551
        %575 = vst.msk [vmem:[%s572 + $0x8] sm:$0xf] %vm408, %v553
        %576 = vst.msk [vmem:[%s572 + $0xc] sm:$0xf] %vm408, %v555
        %577 = vst.msk [vmem:[%s572 + $0x10] sm:$0xf] %vm408, %v557
        %578 = vst.msk [vmem:[%s572 + $0x14] sm:$0xf] %vm408, %v559
        %579 = vst.msk [vmem:[%s572 + $0x18] sm:$0xf] %vm408, %v561
        %580 = vst.msk [vmem:[%s572 + $0x1c] sm:$0xf] %vm408, %v563
        %581 = vrot.lane.b32.xlu0 %v392, 80
        %v582 = vpop.permute.xlu0 %581
        %583 = vrot.lane.b32.xlu0 %v393, 80
        %v584 = vpop.permute.xlu0 %583
        %585 = vrot.lane.b32.xlu0 %v394, 80
        %v586 = vpop.permute.xlu0 %585
        %587 = vrot.lane.b32.xlu0 %v395, 80
        %v588 = vpop.permute.xlu0 %587
        %589 = vrot.lane.b32.xlu0 %v396, 80
        %v590 = vpop.permute.xlu0 %589
        %591 = vrot.lane.b32.xlu0 %v397, 80
        %v592 = vpop.permute.xlu0 %591
        %593 = vrot.lane.b32.xlu0 %v398, 80
        %v594 = vpop.permute.xlu0 %593
        %595 = vrot.lane.b32.xlu0 %v399, 80
        %v596 = vpop.permute.xlu0 %595
        %s605 = scalar_lea.vmem %s240, 96
        %606 = vst.msk [vmem:[%s605] sm:$0xf] %vm408, %v582
        %607 = vst.msk [vmem:[%s605 + $0x4] sm:$0xf] %vm408, %v584
        %608 = vst.msk [vmem:[%s605 + $0x8] sm:$0xf] %vm408, %v586
        %609 = vst.msk [vmem:[%s605 + $0xc] sm:$0xf] %vm408, %v588
        %610 = vst.msk [vmem:[%s605 + $0x10] sm:$0xf] %vm408, %v590
        %611 = vst.msk [vmem:[%s605 + $0x14] sm:$0xf] %vm408, %v592
        %612 = vst.msk [vmem:[%s605 + $0x18] sm:$0xf] %vm408, %v594
        %613 = vst.msk [vmem:[%s605 + $0x1c] sm:$0xf] %vm408, %v596
        %614 = vrot.lane.b32.xlu0 %v392, 16
        %v615 = vpop.permute.xlu0 %614
        %616 = vrot.lane.b32.xlu0 %v393, 16
        %v617 = vpop.permute.xlu0 %616
        %618 = vrot.lane.b32.xlu0 %v394, 16
        %v619 = vpop.permute.xlu0 %618
        %620 = vrot.lane.b32.xlu0 %v395, 16
        %v621 = vpop.permute.xlu0 %620
        %622 = vrot.lane.b32.xlu0 %v396, 16
        %v623 = vpop.permute.xlu0 %622
        %624 = vrot.lane.b32.xlu0 %v397, 16
        %v625 = vpop.permute.xlu0 %624
        %626 = vrot.lane.b32.xlu0 %v398, 16
        %v627 = vpop.permute.xlu0 %626
        %628 = vrot.lane.b32.xlu0 %v399, 16
        %v629 = vpop.permute.xlu0 %628
        %s638 = scalar_lea.vmem %s245, 96
        %639 = vst.msk [vmem:[%s638] sm:$0xf] %vm408, %v615
        %640 = vst.msk [vmem:[%s638 + $0x4] sm:$0xf] %vm408, %v617
        %641 = vst.msk [vmem:[%s638 + $0x8] sm:$0xf] %vm408, %v619
        %642 = vst.msk [vmem:[%s638 + $0xc] sm:$0xf] %vm408, %v621
        %643 = vst.msk [vmem:[%s638 + $0x10] sm:$0xf] %vm408, %v623
        %644 = vst.msk [vmem:[%s638 + $0x14] sm:$0xf] %vm408, %v625
        %645 = vst.msk [vmem:[%s638 + $0x18] sm:$0xf] %vm408, %v627
        %646 = vst.msk [vmem:[%s638 + $0x1c] sm:$0xf] %vm408, %v629
        %p647 = scmp.lt.s32.totalorder %s20, 1
        %s648 = scalar_select %p647, %s20, 1
        %s649 = smul.addr %s648, 32
        %s650 = smul.addr %s649, 4
        %s651 = scalar_lea.vmem %s3, %s650
        %p652 = scmp.lt.s32.totalorder %s20, 1
        %s653 = scalar_select %p652, %s20, 1
        %s654 = smul.addr %s653, 32
        %s655 = smul.addr %s654, 4
        %s656 = scalar_lea.vmem %s4, %s655
        // Predicated region
        $region41: #{tpu_custom_call.1} parent=31 // pred_check
          %p657 = pneg %p106
        $region42: #{tpu_custom_call.1} parent=31 // pred_check_branch
          %659 = sbr.rel (%p657) target = $region44
        $region43: #{tpu_custom_call.1} parent=31 // pred_region
          _
        $region44: #{tpu_custom_call.1} parent=31 // pred_fallthru
          _
        // Predicated region
        $region45: #{tpu_custom_call.1} parent=31 // pred_check
          %p660 = pneg %p132
        $region46: #{tpu_custom_call.1} parent=31 // pred_check_branch
          %662 = sbr.rel (%p660) target = $region48
        $region47: #{tpu_custom_call.1} parent=31 // pred_region
          _
        $region48: #{tpu_custom_call.1} parent=31 // pred_fallthru
          _
      $region32: #{tpu_custom_call.1} parent=5 // pred_fallthru
        _
      %p663 = scmp.le.s32.totalorder 2, %s15
      // Predicated region
      $region49: #{tpu_custom_call.1} parent=5 // pred_check
        %p664 = pneg %p663
      $region50: #{tpu_custom_call.1} parent=5 // pred_check_branch
        %666 = sbr.rel (%p664) target = $region52
      $region51: #{tpu_custom_call.1} parent=5 // pred_region
        %s667 = ssub.s32 %s15, 2
        // Predicated region
        $region53: #{tpu_custom_call.1} parent=51 // pred_check
          %p668 = pneg %p112
        $region54: #{tpu_custom_call.1} parent=51 // pred_check_branch
          %670 = sbr.rel (%p668) target = $region56
        $region55: #{tpu_custom_call.1} parent=51 // pred_region
          %p671 = scmp.lt.s32.totalorder %s21, 1
          %s672 = scalar_select %p671, %s21, 1
          %s673 = smul.addr %s672, 32
          %s674 = smul.addr %s673, 4
          %s675 = scalar_lea.vmem %s3, %s674
        $region56: #{tpu_custom_call.1} parent=51 // pred_fallthru
          _
        // Predicated region
        $region57: #{tpu_custom_call.1} parent=51 // pred_check
          %p676 = pneg %p138
        $region58: #{tpu_custom_call.1} parent=51 // pred_check_branch
          %678 = sbr.rel (%p676) target = $region60
        $region59: #{tpu_custom_call.1} parent=51 // pred_region
          %p679 = scmp.lt.s32.totalorder %s21, 1
          %s680 = scalar_select %p679, %s21, 1
          %s681 = smul.addr %s680, 32
          %s682 = smul.addr %s681, 4
          %s683 = scalar_lea.vmem %s4, %s682
        $region60: #{tpu_custom_call.1} parent=51 // pred_fallthru
          _
      $region52: #{tpu_custom_call.1} parent=5 // pred_fallthru
        _
    $region6: #{tpu_custom_call.1} parent=1 // loop_footer
      %s19 = sadd.s32 1, %s15
    $region7: #{tpu_custom_call.1} parent=1 // loop_footer_branch
      %14 = sbr.rel target = $region3
    $region8: #{tpu_custom_call.1} parent=1 // loop_exit
      _
    %684 = vsyncpa [#allocation3], 1
    %s685 = scalar_lea.sflag [#allocation3], 1
    %686 = vsyncpa %s685, 1
    %687 = vsyncpa [#allocation5], 1

</llo_original>
